<compile_context>
chip_gen: v5e
topology: v5e:2x2
jax: 0.10.0
libtpu: 0.0.40
codegen_flags: <defaults>
</compile_context>

<pallas_src>
import functools

import jax
import jax.numpy as jnp
from jax import lax
from jax.experimental import pallas as pl
from jax.experimental.pallas import tpu as pltpu


def _round_up(n, m):
    return ((n + m - 1) // m) * m


def _cdiv(a, b):
    return (a + b - 1) // b


def _sublane_tile(dtype):
    # Native sublane packing: 8 rows for 32-bit, 16 for 16-bit, 32 for 8-bit.
    return {4: 8, 2: 16, 1: 32}[jnp.dtype(dtype).itemsize]


_VMEM_BUDGET = 48 * 1024 * 1024  # conservative: leaves headroom on v7x (64 MiB phys)


def _vmem_estimate(tb, d_pad, h_pad, cd_bytes):
    """Rough per-call VMEM footprint in bytes (weights double-buffered)."""
    weights = 2 * 2 * d_pad * h_pad * cd_bytes          # W1 + W2, double-buffered
    biases = 2 * 2 * (h_pad + d_pad) * 4                # f32 bias rows
    x_io = 2 * 2 * tb * d_pad * cd_bytes                # streamed x + out tiles
    interm = tb * h_pad * (4 + cd_bytes) + 2 * tb * d_pad * 4
    return weights + biases + x_io + interm


def _select_tile_b(batch, block_b, d_pad, h_pad, compute_dtype):
    cd_bytes = jnp.dtype(compute_dtype).itemsize
    sub = _sublane_tile(compute_dtype)
    # >= 2 tiles and an even count: balances the "parallel" batch axis across
    # v7x's two TensorCores; TB ~ ceil(B / n_tiles) minimizes batch padding.
    nt = max(2, _cdiv(batch, max(block_b, 1)))
    if nt % 2:
        nt += 1
    tb = max(_round_up(_cdiv(batch, nt), sub), sub)
    # Shrink TB until the VMEM estimate fits (matters when D/H scale, esp. v7x).
    while _vmem_estimate(tb, d_pad, h_pad, cd_bytes) > _VMEM_BUDGET and tb > sub:
        tb = max(_round_up(tb // 2, sub), sub)
    return tb


# --------------------------------------------------------------------------- #
# Parameter / state preparation (hoisted out of the per-call path)
# --------------------------------------------------------------------------- #
def prepare_params(w1, b1, w2, b2, *, compute_dtype=jnp.bfloat16):
    """Pad + cast weights ONCE into the lane-dense layout.

    w1: (D, H)   b1: (H,) or (1, H)   w2: (H, D)   b2: (D,) or (1, D)
    MXU inputs use `compute_dtype` (default bf16); biases stay f32 because the
    bias add and tanh always run in f32.
    """
    w1 = jnp.asarray(w1)
    w2 = jnp.asarray(w2)
    d, h = w1.shape
    d_pad, h_pad = _round_up(d, 128), _round_up(h, 128)
    cd = jnp.dtype(compute_dtype)
    w1p = jnp.zeros((d_pad, h_pad), cd).at[:d, :h].set(w1.astype(cd))
    w2p = jnp.zeros((h_pad, d_pad), cd).at[:h, :d].set(w2.astype(cd))
    b1p = jnp.zeros((1, h_pad), jnp.float32).at[:, :h].set(
        jnp.asarray(b1, jnp.float32).reshape(1, h))
    b2p = jnp.zeros((1, d_pad), jnp.float32).at[:, :d].set(
        jnp.asarray(b2, jnp.float32).reshape(1, d))
    return dict(w1=w1p, b1=b1p, w2=w2p, b2=b2p,
                in_dim=d, hidden_dim=h, d_pad=d_pad, h_pad=h_pad,
                compute_dtype=cd)


def pad_state(x, params, *, block_b=1024):
    """Pad the state ONCE into the lane-dense (B_pad, D_pad) compute-dtype layout.

    An ODE solver should keep the state in this layout across steps and only
    call unpad_state at the end of the solve.
    """
    b, d = x.shape
    assert d == params["in_dim"], "state feature dim mismatch"
    cd = params["compute_dtype"]
    tb = _select_tile_b(b, block_b, params["d_pad"], params["h_pad"], cd)
    b_pad = _round_up(b, tb)
    x_pad = jnp.zeros((b_pad, params["d_pad"]), cd).at[:b, :d].set(x.astype(cd))
    return x_pad, tb


def unpad_state(x_pad, batch, in_dim, dtype=None):
    out = x_pad[:batch, :in_dim]
    return out if dtype is None else out.astype(dtype)


# --------------------------------------------------------------------------- #
# Kernels
# --------------------------------------------------------------------------- #
def odefunc_kernel(x_ref, w1_ref, b1_ref, w2_ref, b2_ref, o_ref):
    # Fused: out = tanh(x @ W1 + b1) @ W2 + b2   (one grid step = one batch tile)
    h = jnp.dot(x_ref[...], w1_ref[...],
                preferred_element_type=jnp.float32)       # MXU, f32 accumulate
    h = jnp.tanh(h + b1_ref[...])                         # bias + tanh in f32 (EUP)
    h = h.astype(w2_ref.dtype)                            # back to MXU dtype
    y = jnp.dot(h, w2_ref[...], preferred_element_type=jnp.float32)
    o_ref[...] = (y + b2_ref[...]).astype(o_ref.dtype)


def odefunc_euler_kernel(x_ref, w1_ref, b1_ref, w2_ref, b2_ref, o_ref, *,
                         dt, n_steps):
    # Fused n-step explicit Euler: state carried in f32 across steps, weights
    # loaded into VMEM once, state round-trips HBM once for the whole solve.
    def step(_, x):
        h = jnp.dot(x.astype(w1_ref.dtype), w1_ref[...],
                    preferred_element_type=jnp.float32)
        h = jnp.tanh(h + b1_ref[...]).astype(w2_ref.dtype)
        y = jnp.dot(h, w2_ref[...], preferred_element_type=jnp.float32)
        return x + dt * (y + b2_ref[...])

    x0 = x_ref[...].astype(jnp.float32)
    o_ref[...] = lax.fori_loop(0, n_steps, step, x0).astype(o_ref.dtype)


def _call(kernel, x_pad, params, tb, out_dtype):
    b_pad, d_pad = x_pad.shape
    h_pad = params["h_pad"]
    assert d_pad == params["d_pad"] and b_pad % tb == 0
    cd_bytes = jnp.dtype(params["compute_dtype"]).itemsize
    est = _vmem_estimate(tb, d_pad, h_pad, cd_bytes)
    assert est <= _VMEM_BUDGET, "tile selection exceeded the VMEM budget"
    vmem_limit = int(min(max(est + (8 << 20), 32 << 20), 56 << 20))
    nb = b_pad // tb
    return pl.pallas_call(
        kernel,
        out_shape=jax.ShapeDtypeStruct((b_pad, d_pad), out_dtype),
        grid=(nb,),
        in_specs=[
            pl.BlockSpec((tb, d_pad), lambda i: (i, 0)),      # x: streamed tiles
            pl.BlockSpec((d_pad, h_pad), lambda i: (0, 0)),   # W1: VMEM-resident
            pl.BlockSpec((1, h_pad), lambda i: (0, 0)),       # b1 (f32)
            pl.BlockSpec((h_pad, d_pad), lambda i: (0, 0)),   # W2: VMEM-resident
            pl.BlockSpec((1, d_pad), lambda i: (0, 0)),       # b2 (f32)
        ],
        out_specs=pl.BlockSpec((tb, d_pad), lambda i: (i, 0)),
        compiler_params=pltpu.CompilerParams(
            dimension_semantics=("parallel",),                # shards v7x's 2 TCs
            vmem_limit_bytes=vmem_limit),
    )(x_pad, params["w1"], params["b1"], params["w2"], params["b2"])


# --------------------------------------------------------------------------- #
# Public entry points
# --------------------------------------------------------------------------- #
def odefunc_forward_padded(x_pad, params, tb):
    """One forward pass on the padded state.  Output stays padded and in the
    compute dtype so it can feed the next solver stage without re-padding."""
    return _call(odefunc_kernel, x_pad, params, tb, params["compute_dtype"])


def odefunc_forward(t, x, params, *, block_b=1024):
    """Pallas equivalent of ODEFunc.forward(t, x). `t` is unused (matches PyTorch)."""
    del t
    b, d = x.shape
    x_pad, tb = pad_state(x, params, block_b=block_b)
    out_pad = odefunc_forward_padded(x_pad, params, tb)
    return unpad_state(out_pad, b, d, x.dtype)


def odefunc_euler(x, params, *, dt, n_steps, block_b=1024):
    """n_steps of explicit Euler (x += dt * net(x)) fused into ONE pallas_call:
    weights DMA'd once, state kept on-chip in f32 across all stages."""
    b, d = x.shape
    x_pad, tb = pad_state(x, params, block_b=block_b)
    kern = functools.partial(odefunc_euler_kernel, dt=float(dt),
                             n_steps=int(n_steps))
    out_pad = _call(kern, x_pad, params, tb, params["compute_dtype"])
    return unpad_state(out_pad, b, d, x.dtype)


def init_params(key, in_dim, hidden_dim, dtype=jnp.float32):
    """Deterministic init mimicking nn.Linear's U(-1/sqrt(fan_in), 1/sqrt(fan_in))."""
    k1, k2, k3, k4 = jax.random.split(key, 4)
    bound1 = 1.0 / (in_dim ** 0.5)
    bound2 = 1.0 / (hidden_dim ** 0.5)
    w1 = jax.random.uniform(k1, (in_dim, hidden_dim), dtype, -bound1, bound1)
    b1 = jax.random.uniform(k2, (1, hidden_dim), dtype, -bound1, bound1)
    w2 = jax.random.uniform(k3, (hidden_dim, in_dim), dtype, -bound2, bound2)
    b2 = jax.random.uniform(k4, (1, in_dim), dtype, -bound2, bound2)
    return w1, b1, w2, b2


if __name__ == "__main__":
    in_dim, hidden_dim, batch = 16, 32, 8
    key = jax.random.PRNGKey(0)
    kx, kp = jax.random.split(key)

    x = jax.random.normal(kx, (batch, in_dim), jnp.float32)
    w1, b1, w2, b2 = init_params(kp, in_dim, hidden_dim)
    t = jnp.float32(0.0)  # unused, kept to match ODEFunc.forward signature

    # Pure-JAX reference
    ref = jnp.tanh(x @ w1 + b1) @ w2 + b2

    # f32 MXU path (bit-accurate vs reference)
    p32 = prepare_params(w1, b1, w2, b2, compute_dtype=jnp.float32)
    out_f32 = jax.block_until_ready(odefunc_forward(t, x, p32))
    assert out_f32.shape == (batch, in_dim)
    assert jnp.allclose(out_f32, ref, atol=1e-5, rtol=1e-5), "f32 mismatch vs reference"

    # Default bf16 MXU path (f32 accumulation / bias / tanh); looser tolerance
    # because the activations/outputs round to bf16.
    pbf = prepare_params(w1, b1, w2, b2)
    out_bf = jax.block_until_ready(odefunc_forward(t, x, pbf))
    assert out_bf.shape == (batch, in_dim)
    assert jnp.allclose(out_bf, ref, atol=5e-2, rtol=5e-2), "bf16 mismatch vs reference"

    # Fused multi-step Euler (weights + state round-trip HBM once for all steps)
    dt_val, n_steps = 0.1, 4
    x_ref_e = x
    for _ in range(n_steps):
        x_ref_e = x_ref_e + dt_val * (jnp.tanh(x_ref_e @ w1 + b1) @ w2 + b2)
    out_euler = jax.block_until_ready(
        odefunc_euler(x, p32, dt=dt_val, n_steps=n_steps))
    assert out_euler.shape == (batch, in_dim)
    assert jnp.allclose(out_euler, x_ref_e, atol=1e-4, rtol=1e-4), "euler mismatch"

    print("KERNEL_OK")
</pallas_src>

<mosaic_0001>
module attributes {stable_mosaic.version = 11 : i64} {
  func.func @odefunc_kernel(%arg0: i32, %arg1: memref<8x128xf32, #tpu.memory_space<vmem>>, %arg2: memref<128x128xf32, #tpu.memory_space<vmem>>, %arg3: memref<1x128xf32, #tpu.memory_space<vmem>>, %arg4: memref<128x128xf32, #tpu.memory_space<vmem>>, %arg5: memref<1x128xf32, #tpu.memory_space<vmem>>, %arg6: memref<8x128xf32, #tpu.memory_space<vmem>>) attributes {dimension_semantics = [#tpu.dimension_semantics<parallel>], iteration_bounds = array<i64: 1>, scalar_prefetch = 0 : i64, scratch_operands = 0 : i64, tpu.core_type = #tpu.core_type<tc>, window_params = [{transform_indices = @transform_0, window_bounds = array<i64: 8, 128>}, {pipeline_mode = #tpu.pipeline_mode<synchronous>, transform_indices = @transform_1, window_bounds = array<i64: 128, 128>}, {pipeline_mode = #tpu.pipeline_mode<synchronous>, transform_indices = @transform_2, window_bounds = array<i64: 1, 128>}, {pipeline_mode = #tpu.pipeline_mode<synchronous>, transform_indices = @transform_3, window_bounds = array<i64: 128, 128>}, {pipeline_mode = #tpu.pipeline_mode<synchronous>, transform_indices = @transform_4, window_bounds = array<i64: 1, 128>}, {transform_indices = @transform_5, window_bounds = array<i64: 8, 128>}]} {
    %c0 = arith.constant 0 : index
    %c0_0 = arith.constant 0 : index
    %0 = vector.load %arg1[%c0, %c0_0] : memref<8x128xf32, #tpu.memory_space<vmem>>, vector<8x128xf32>
    %c0_1 = arith.constant 0 : index
    %c0_2 = arith.constant 0 : index
    %1 = vector.load %arg2[%c0_1, %c0_2] : memref<128x128xf32, #tpu.memory_space<vmem>>, vector<128x128xf32>
    %cst = arith.constant dense<0.000000e+00> : vector<8x128xf32>
    %2 = tpu.matmul %0, %1, %cst {dimension_numbers = #tpu.dot_dimension_numbers<[1], [0], [0], [1], [0, 0, 1, 1], [], []>} : vector<8x128xf32>, vector<128x128xf32>, vector<8x128xf32> -> vector<8x128xf32>
    %c0_3 = arith.constant 0 : index
    %c0_4 = arith.constant 0 : index
    %3 = vector.load %arg3[%c0_3, %c0_4] : memref<1x128xf32, #tpu.memory_space<vmem>>, vector<1x128xf32>
    %4 = vector.broadcast %3 : vector<1x128xf32> to vector<8x128xf32>
    %5 = arith.addf %2, %4 : vector<8x128xf32>
    %6 = math.tanh %5 : vector<8x128xf32>
    %c0_5 = arith.constant 0 : index
    %c0_6 = arith.constant 0 : index
    %7 = vector.load %arg4[%c0_5, %c0_6] : memref<128x128xf32, #tpu.memory_space<vmem>>, vector<128x128xf32>
    %cst_7 = arith.constant dense<0.000000e+00> : vector<8x128xf32>
    %8 = tpu.matmul %6, %7, %cst_7 {dimension_numbers = #tpu.dot_dimension_numbers<[1], [0], [0], [1], [0, 0, 1, 1], [], []>} : vector<8x128xf32>, vector<128x128xf32>, vector<8x128xf32> -> vector<8x128xf32>
    %c0_8 = arith.constant 0 : index
    %c0_9 = arith.constant 0 : index
    %9 = vector.load %arg5[%c0_8, %c0_9] : memref<1x128xf32, #tpu.memory_space<vmem>>, vector<1x128xf32>
    %10 = vector.broadcast %9 : vector<1x128xf32> to vector<8x128xf32>
    %11 = arith.addf %8, %10 : vector<8x128xf32>
    %c0_10 = arith.constant 0 : index
    %c0_11 = arith.constant 0 : index
    %12 = vector.load %arg6[%c0_10, %c0_11] : memref<8x128xf32, #tpu.memory_space<vmem>>, vector<8x128xf32>
    tpu.vector_store %arg6[%c0_10, %c0_11], %11 {strides = array<i32>} : memref<8x128xf32, #tpu.memory_space<vmem>>, vector<8x128xf32>,
    return
  }
  func.func @transform_0(%arg0: i32) -> (i32, i32) {
    %c0_i32 = arith.constant 0 : i32
    %c0_i32_0 = arith.constant 0 : i32
    return %arg0, %c0_i32 : i32, i32
  }
  func.func @transform_1(%arg0: i32) -> (i32, i32) {
    %c0_i32 = arith.constant 0 : i32
    %c0_i32_0 = arith.constant 0 : i32
    %c0_i32_1 = arith.constant 0 : i32
    return %c0_i32, %c0_i32_0 : i32, i32
  }
  func.func @transform_2(%arg0: i32) -> (i32, i32) {
    %c0_i32 = arith.constant 0 : i32
    %c0_i32_0 = arith.constant 0 : i32
    %c0_i32_1 = arith.constant 0 : i32
    return %c0_i32, %c0_i32_0 : i32, i32
  }
  func.func @transform_3(%arg0: i32) -> (i32, i32) {
    %c0_i32 = arith.constant 0 : i32
    %c0_i32_0 = arith.constant 0 : i32
    %c0_i32_1 = arith.constant 0 : i32
    return %c0_i32, %c0_i32_0 : i32, i32
  }
  func.func @transform_4(%arg0: i32) -> (i32, i32) {
    %c0_i32 = arith.constant 0 : i32
    %c0_i32_0 = arith.constant 0 : i32
    %c0_i32_1 = arith.constant 0 : i32
    return %c0_i32, %c0_i32_0 : i32, i32
  }
  func.func @transform_5(%arg0: i32) -> (i32, i32) {
    %c0_i32 = arith.constant 0 : i32
    %c0_i32_0 = arith.constant 0 : i32
    return %arg0, %c0_i32 : i32, i32
  }
}

</mosaic_0001>

<llo_original>
// kernel: tpu_custom_call.1
$region0: #{tpu_custom_call.1}
  #allocation0 [shape = 'u32[]', space=smem, size = 0x4, offset = 0x4, fixed_abs, tag = 'smem constant byte address 0x4 - core index']
  #allocation1 [shape = 'u32[72,128]{1,0:T(1,128)}', space=vmem, size = 0x9000, scoped, tag = 'internal scratch']
  %s0 = inlined_call_operand.hbm [shape: f32[8,128], index: 0, kind: input, shape index: {}]
  %s1 = inlined_call_operand.hbm [shape: f32[128,128], index: 1, kind: input, shape index: {}]
  %s2 = inlined_call_operand.vmem [shape: f32[1,128], index: 2, kind: input, shape index: {}]
  %s3 = inlined_call_operand.hbm [shape: f32[128,128], index: 3, kind: input, shape index: {}]
  %s4 = inlined_call_operand.vmem [shape: f32[1,128], index: 4, kind: input, shape index: {}]
  %s5 = inlined_call_operand.hbm [shape: f32[8,128], index: 5, kind: output, shape index: {}]
  %s6 = sld [smem:[#allocation0]]
  $region42: #{tpu_custom_call.1} parent=0
    _
  %s8 = ssub.s32 1, %s6
  %s9 = scalar_select 0, %s8, %s6
  $region1: #{tpu_custom_call.1} parent=0
    #allocation2 [shape = 'u8[4096]{0}', space=vmem, size = 0x1000, scoped, tag = 'input window, operand 0, single buffered']
    #allocation3 [shape = 's32[1]{0}', space=sflag, size = 0x4, scoped, tag = 'scoped memory for tpu_custom_call.1']
    #allocation4 [shape = 's32[1]{0}', space=sflag, size = 0x4, scoped, tag = 'scoped memory for tpu_custom_call.1']
    #allocation5 [shape = 'u8[65536]{0}', space=vmem, size = 0x10000, scoped, tag = 'input window, operand 1, single buffered']
    #allocation6 [shape = 's32[1]{0}', space=sflag, size = 0x4, scoped, tag = 'scoped memory for tpu_custom_call.1']
    #allocation7 [shape = 'u8[65536]{0}', space=vmem, size = 0x10000, scoped, tag = 'input window, operand 3, single buffered']
    #allocation8 [shape = 'u8[4096]{0}', space=vmem, size = 0x1000, scoped, tag = 'output window, operand 0, single buffered']
    %10 = vsyncpa [#allocation3], 0
    %11 = vsyncpa [#allocation6], 0
    %12 = vsyncpa [#allocation4], 0
    // Predicated region
    $region2: #{tpu_custom_call.1} parent=1 // pred_check
      _
    $region3: #{tpu_custom_call.1} parent=1 // pred_check_branch
      %14 = sbr.rel (0) target = $region5
    $region4: #{tpu_custom_call.1} parent=1 // pred_region
      %16 = vsyncadd [#allocation3], 0
      %s18 = sshll.u32 %s0, 4
      %s19 = int_to_ptr.hbm [resolvable:$true] %s18
      %s20 = sshll.u32 [#allocation2], 4
      %s21 = int_to_ptr.vmem [resolvable:$true] %s20
      %23 = dma.hbm_to_vmem [thread:$0]  %s19, 128, %s21, [#allocation3]
    $region5: #{tpu_custom_call.1} parent=1 // pred_fallthru
      _
    // Predicated region
    $region6: #{tpu_custom_call.1} parent=1 // pred_check
      _
    $region7: #{tpu_custom_call.1} parent=1 // pred_check_branch
      %25 = sbr.rel (0) target = $region9
    $region8: #{tpu_custom_call.1} parent=1 // pred_region
      %27 = vsyncadd [#allocation6], 0
      %s28 = sshll.u32 %s1, 4
      %s29 = int_to_ptr.hbm [resolvable:$true] %s28
      %s30 = sshll.u32 [#allocation5], 4
      %s31 = int_to_ptr.vmem [resolvable:$true] %s30
      %36 = dma.hbm_to_vmem [thread:$0]  %s29, 2048, %s31, [#allocation6], 128, 128, 8
    $region9: #{tpu_custom_call.1} parent=1 // pred_fallthru
      _
    // Predicated region
    $region10: #{tpu_custom_call.1} parent=1 // pred_check
      _
    $region11: #{tpu_custom_call.1} parent=1 // pred_check_branch
      %38 = sbr.rel (0) target = $region13
    $region12: #{tpu_custom_call.1} parent=1 // pred_region
      _
    $region13: #{tpu_custom_call.1} parent=1 // pred_fallthru
      _
    // Predicated region
    $region14: #{tpu_custom_call.1} parent=1 // pred_check
      _
    $region15: #{tpu_custom_call.1} parent=1 // pred_check_branch
      %40 = sbr.rel (0) target = $region17
    $region16: #{tpu_custom_call.1} parent=1 // pred_region
      %42 = vsyncadd [#allocation6], 0
      %s43 = sshll.u32 %s3, 4
      %s44 = int_to_ptr.hbm [resolvable:$true] %s43
      %s45 = sshll.u32 [#allocation7], 4
      %s46 = int_to_ptr.vmem [resolvable:$true] %s45
      %51 = dma.hbm_to_vmem [thread:$0]  %s44, 2048, %s46, [#allocation6], 128, 128, 8
    $region17: #{tpu_custom_call.1} parent=1 // pred_fallthru
      _
    // Predicated region
    $region18: #{tpu_custom_call.1} parent=1 // pred_check
      _
    $region19: #{tpu_custom_call.1} parent=1 // pred_check_branch
      %53 = sbr.rel (0) target = $region21
    $region20: #{tpu_custom_call.1} parent=1 // pred_region
      _
    $region21: #{tpu_custom_call.1} parent=1 // pred_fallthru
      _
    // Predicated region
    $region22: #{tpu_custom_call.1} parent=1 // pred_check
      _
    $region23: #{tpu_custom_call.1} parent=1 // pred_check_branch
      %55 = sbr.rel (0) target = $region25
    $region24: #{tpu_custom_call.1} parent=1 // pred_region
      %57 = dma.done [#allocation3], 128
    $region25: #{tpu_custom_call.1} parent=1 // pred_fallthru
      _
    // Predicated region
    $region26: #{tpu_custom_call.1} parent=1 // pred_check
      _
    $region27: #{tpu_custom_call.1} parent=1 // pred_check_branch
      %59 = sbr.rel (0) target = $region29
    $region28: #{tpu_custom_call.1} parent=1 // pred_region
      %61 = dma.done [#allocation6], 2048
    $region29: #{tpu_custom_call.1} parent=1 // pred_fallthru
      _
    // Predicated region
    $region30: #{tpu_custom_call.1} parent=1 // pred_check
      _
    $region31: #{tpu_custom_call.1} parent=1 // pred_check_branch
      %63 = sbr.rel (0) target = $region33
    $region32: #{tpu_custom_call.1} parent=1 // pred_region
      %65 = dma.done [#allocation6], 2048
    $region33: #{tpu_custom_call.1} parent=1 // pred_fallthru
      _
    %v66 = vld [vmem:[#allocation2] sm:$0xff]
    %v67 = vld [vmem:[#allocation5] sm:$0xff]
    %v68 = vld [vmem:[#allocation5 + $0x8] sm:$0xff]
    %v69 = vld [vmem:[#allocation5 + $0x10] sm:$0xff]
    %v70 = vld [vmem:[#allocation5 + $0x18] sm:$0xff]
    %v71 = vld [vmem:[#allocation5 + $0x20] sm:$0xff]
    %v72 = vld [vmem:[#allocation5 + $0x28] sm:$0xff]
    %v73 = vld [vmem:[#allocation5 + $0x30] sm:$0xff]
    %v74 = vld [vmem:[#allocation5 + $0x38] sm:$0xff]
    %v75 = vld [vmem:[#allocation5 + $0x40] sm:$0xff]
    %v76 = vld [vmem:[#allocation5 + $0x48] sm:$0xff]
    %v77 = vld [vmem:[#allocation5 + $0x50] sm:$0xff]
    %v78 = vld [vmem:[#allocation5 + $0x58] sm:$0xff]
    %v79 = vld [vmem:[#allocation5 + $0x60] sm:$0xff]
    %v80 = vld [vmem:[#allocation5 + $0x68] sm:$0xff]
    %v81 = vld [vmem:[#allocation5 + $0x70] sm:$0xff]
    %v82 = vld [vmem:[#allocation5 + $0x78] sm:$0xff]
    %v83 = vld [vmem:[%s2] sm:$0x1]
    %v85 = vperm.slane %v83, 0
    %87 = vmatpush.msra.mxu0 %v82
    %88 = vmatpush.msra.mxu0 %v81
    %89 = vmatpush.msra.mxu0 %v80
    %90 = vmatpush.msra.mxu0 %v79
    %91 = vmatpush.msra.mxu0 %v78
    %92 = vmatpush.msra.mxu0 %v77
    %93 = vmatpush.msra.mxu0 %v76
    %94 = vmatpush.msra.mxu0 %v75
    %95 = vmatpush.msra.mxu0 %v74
    %96 = vmatpush.msra.mxu0 %v73
    %97 = vmatpush.msra.mxu0 %v72
    %98 = vmatpush.msra.mxu0 %v71
    %99 = vmatpush.msra.mxu0 %v70
    %100 = vmatpush.msra.mxu0 %v69
    %101 = vmatpush.msra.mxu0 %v68
    %102 = vmatpush.msra.mxu0 %v67
    %103 = vmatmul.f32.gmra.mxu0 %v66
    %v104 = vpop.f32.mrf.mxu0
    %v105 = vadd.f32 %v85, %v104
    %106 = vdwg.mxu0
    %v107 = vtanh.pop %v105
    %v108 = vld [vmem:[#allocation7] sm:$0xff]
    %v109 = vld [vmem:[#allocation7 + $0x8] sm:$0xff]
    %v110 = vld [vmem:[#allocation7 + $0x10] sm:$0xff]
    %v111 = vld [vmem:[#allocation7 + $0x18] sm:$0xff]
    %v112 = vld [vmem:[#allocation7 + $0x20] sm:$0xff]
    %v113 = vld [vmem:[#allocation7 + $0x28] sm:$0xff]
    %v114 = vld [vmem:[#allocation7 + $0x30] sm:$0xff]
    %v115 = vld [vmem:[#allocation7 + $0x38] sm:$0xff]
    %v116 = vld [vmem:[#allocation7 + $0x40] sm:$0xff]
    %v117 = vld [vmem:[#allocation7 + $0x48] sm:$0xff]
    %v118 = vld [vmem:[#allocation7 + $0x50] sm:$0xff]
    %v119 = vld [vmem:[#allocation7 + $0x58] sm:$0xff]
    %v120 = vld [vmem:[#allocation7 + $0x60] sm:$0xff]
    %v121 = vld [vmem:[#allocation7 + $0x68] sm:$0xff]
    %v122 = vld [vmem:[#allocation7 + $0x70] sm:$0xff]
    %v123 = vld [vmem:[#allocation7 + $0x78] sm:$0xff]
    %v124 = vld [vmem:[%s4] sm:$0x1]
    %v126 = vperm.slane %v124, 0
    %128 = vmatpush.msra.mxu0 %v123
    %129 = vmatpush.msra.mxu0 %v122
    %130 = vmatpush.msra.mxu0 %v121
    %131 = vmatpush.msra.mxu0 %v120
    %132 = vmatpush.msra.mxu0 %v119
    %133 = vmatpush.msra.mxu0 %v118
    %134 = vmatpush.msra.mxu0 %v117
    %135 = vmatpush.msra.mxu0 %v116
    %136 = vmatpush.msra.mxu0 %v115
    %137 = vmatpush.msra.mxu0 %v114
    %138 = vmatpush.msra.mxu0 %v113
    %139 = vmatpush.msra.mxu0 %v112
    %140 = vmatpush.msra.mxu0 %v111
    %141 = vmatpush.msra.mxu0 %v110
    %142 = vmatpush.msra.mxu0 %v109
    %143 = vmatpush.msra.mxu0 %v108
    %144 = vmatmul.f32.gmra.mxu0 %v107
    %v145 = vpop.f32.mrf.mxu0
    %v146 = vadd.f32 %v126, %v145
    %147 = vdwg.mxu0
    %148 = vst [vmem:[#allocation8] sm:$0xff] %v146
    // Predicated region
    $region34: #{tpu_custom_call.1} parent=1 // pred_check
      _
    $region35: #{tpu_custom_call.1} parent=1 // pred_check_branch
      %150 = sbr.rel (0) target = $region37
    $region36: #{tpu_custom_call.1} parent=1 // pred_region
      %152 = vsyncadd [#allocation4], 0
      %s154 = sshll.u32 [#allocation8], 4
      %s155 = int_to_ptr.vmem [resolvable:$true] %s154
      %s156 = sshll.u32 %s5, 4
      %s157 = int_to_ptr.hbm [resolvable:$true] %s156
      %159 = dma.vmem_to_hbm [thread:$0]  %s155, 128, %s157, [#allocation4]
    $region37: #{tpu_custom_call.1} parent=1 // pred_fallthru
      _
    // Predicated region
    $region38: #{tpu_custom_call.1} parent=1 // pred_check
      _
    $region39: #{tpu_custom_call.1} parent=1 // pred_check_branch
      %161 = sbr.rel (0) target = $region41
    $region40: #{tpu_custom_call.1} parent=1 // pred_region
      %163 = dma.done [#allocation4], 128
    $region41: #{tpu_custom_call.1} parent=1 // pred_fallthru
      _
    %164 = vsyncpa [#allocation3], 1
    %165 = vsyncpa [#allocation6], 1
    %166 = vsyncpa [#allocation4], 1

</llo_original>
